<compile_context>
chip_gen: v7x
topology: tpu7x:2x2x1
jax: 0.10.0
libtpu: 0.0.40
codegen_flags: <defaults>
</compile_context>

<pallas_src>
import math
from functools import partial

import jax
import jax.numpy as jnp
from jax.experimental import pallas as pl
from jax.experimental.pallas import tpu as pltpu


def _attention_kernel(x_ref, w_ref, b_ref, o_ref):
    """One grid step: PT independent problems, each (B, N), sharing parameters."""
    pt, bsz, n = x_ref.shape

    # Fold problems onto the sublane (row) axis for the shared projections.
    # (PT, B, N) -> (PT*B, N): minor dim unchanged (B == 8 == sublane count), so this
    # is a layout-preserving fold.
    x2 = x_ref[...].reshape(pt * bsz, n)

    # Shared-weight projections. Weights are pre-transposed to x @ W form and the
    # 1/sqrt(N) score scale is folded into the Q weight/bias at prep time. Stacked
    # (3, N, N) weight: major-axis indexing, every projection output starts at lane 0
    # (no sub-128 lane-offset slices of a fused (.., 3N) result).
    q = jnp.dot(x2, w_ref[0], preferred_element_type=jnp.float32) + b_ref[0]
    k = jnp.dot(x2, w_ref[1], preferred_element_type=jnp.float32) + b_ref[1]
    v = jnp.dot(x2, w_ref[2], preferred_element_type=jnp.float32) + b_ref[2]

    # Back to per-problem (PT, B, N) for the batched attention (free unfold).
    q = q.reshape(pt, bsz, n)
    k = k.reshape(pt, bsz, n)
    v = v.reshape(pt, bsz, n)

    # Per-problem scores (PT, B, B); contraction over the feature axis of both
    # operands, batched over the problem axis (no transposed copy materialized).
    s = jnp.einsum('pqd,pkd->pqk', q, k, preferred_element_type=jnp.float32)

    # Numerically stable softmax over the last axis.
    m = jnp.max(s, axis=-1, keepdims=True)
    e = jnp.exp(s - m)
    denom = jnp.sum(e, axis=-1, keepdims=True)
    p = e * pl.reciprocal(denom, approx=False)  # approx=True breaks 1e-5 parity

    # Attended: (PT, B, N) -> direct store into the output block.
    o_ref[...] = jnp.einsum('pqk,pkd->pqd', p, v, preferred_element_type=jnp.float32)


def prepare_params(wq, bq, wk, bk, wv, bv):
    """One-time parameter fold (call once at init, NOT per forward):
       - pre-transpose each nn.Linear weight so the kernel does x @ W (no in-kernel .T)
       - fold the 1/sqrt(N) score scale into the Q weight AND bias
       - stack into a (3, N, N) weight and (3, 1, N) bias (major-axis Q/K/V split)."""
    n = wq.shape[0]
    scale = jnp.float32(1.0 / math.sqrt(n))
    w = jnp.stack([wq.T * scale, wk.T, wv.T]).astype(jnp.float32)       # (3, N, N)
    b = jnp.stack([bq.reshape(1, n) * scale,
                   bk.reshape(1, n),
                   bv.reshape(1, n)]).astype(jnp.float32)               # (3, 1, N)
    return w, b


@partial(jax.jit, static_argnames=("problems_per_tile",))
def self_attention_batched(xs, w, b, *, problems_per_tile=128):
    """xs: (P, B, N) independent problems sharing the pre-folded parameters (w, b)."""
    P, B, N = xs.shape
    pt = min(problems_per_tile, P)
    # Pad the problem axis to a tile multiple (padded problems are numerically benign:
    # softmax of constant scores is uniform, no NaNs) and slice the result back.
    p_pad = pl.cdiv(P, pt) * pt
    if p_pad != P:
        xs = jnp.pad(xs, ((0, p_pad - P), (0, 0), (0, 0)))

    out = pl.pallas_call(
        _attention_kernel,
        out_shape=jax.ShapeDtypeStruct((p_pad, B, N), jnp.float32),
        grid_spec=pltpu.PrefetchScalarGridSpec(
            num_scalar_prefetch=0,
            grid=(p_pad // pt,),
            in_specs=[
                pl.BlockSpec((pt, B, N), lambda i: (i, 0, 0)),
                pl.BlockSpec((3, N, N), lambda i: (0, 0, 0)),   # resident across steps
                pl.BlockSpec((3, 1, N), lambda i: (0, 0, 0)),   # resident across steps
            ],
            out_specs=pl.BlockSpec((pt, B, N), lambda i: (i, 0, 0)),
        ),
        compiler_params=pltpu.CompilerParams(
            # Problem chunks are independent -> shard grid steps across both TCs on v7x.
            dimension_semantics=("parallel",),
            # Sized against v7x's 64 MiB physical / 32 MiB default-scoped VMEM; the
            # per-step footprint (double-buffered x/out tiles + q/k/v/scores) is only
            # a few hundred KiB even at pt=128.
            vmem_limit_bytes=32 * 1024 * 1024,
        ),
    )(xs, w, b)
    return out[:P]


@jax.jit
def self_attention(x, w, b):
    """SelfAttentionModule.forward for a single (B, N) input."""
    return self_attention_batched(x[None], w, b, problems_per_tile=1)[0]


def _ref_self_attention(x, wq, bq, wk, bk, wv, bv):
    q = x @ wq.T + bq
    k = x @ wk.T + bk
    v = x @ wv.T + bv
    s = (q @ k.T) / jnp.sqrt(jnp.float32(x.shape[-1]))
    return jax.nn.softmax(s, axis=-1) @ v


if __name__ == "__main__":
    B, N = 8, 32      # shapes implied by forward(): x is (batch_rows, feature_dim)
    P = 64            # independent problems for the batched path (small demo)

    key = jax.random.PRNGKey(0)
    kx, kxs, kq, kbq, kk, kbk, kv, kbv = jax.random.split(key, 8)

    # Deterministic parameter init mirroring nn.Linear's uniform(-1/sqrt(N), 1/sqrt(N)).
    # NOTE: the PyTorch module re-randomizes its Linear layers on every forward; here
    # the parameters are explicit inputs prepared once.
    bound = 1.0 / math.sqrt(N)
    x = jax.random.normal(kx, (B, N), dtype=jnp.float32)
    xs = jax.random.normal(kxs, (P, B, N), dtype=jnp.float32)
    wq = jax.random.uniform(kq, (N, N), jnp.float32, -bound, bound)
    bq = jax.random.uniform(kbq, (N,), jnp.float32, -bound, bound)
    wk = jax.random.uniform(kk, (N, N), jnp.float32, -bound, bound)
    bk = jax.random.uniform(kbk, (N,), jnp.float32, -bound, bound)
    wv = jax.random.uniform(kv, (N, N), jnp.float32, -bound, bound)
    bv = jax.random.uniform(kbv, (N,), jnp.float32, -bound, bound)

    # One-time parameter fold, hoisted out of the per-call path.
    w_stack, b_stack = jax.block_until_ready(prepare_params(wq, bq, wk, bk, wv, bv))

    # Single-problem path (matches the module's forward).
    out = jax.block_until_ready(self_attention(x, w_stack, b_stack))
    ref = _ref_self_attention(x, wq, bq, wk, bk, wv, bv)
    assert out.shape == (B, N)
    assert jnp.allclose(out, ref, atol=1e-5, rtol=1e-5), "single-problem mismatch"

    # Batched path: P independent problems in one pallas_call, gridded + parallel.
    outs = jax.block_until_ready(
        self_attention_batched(xs, w_stack, b_stack, problems_per_tile=32))
    refs = jax.vmap(lambda xp: _ref_self_attention(xp, wq, bq, wk, bk, wv, bv))(xs)
    assert outs.shape == (P, B, N)
    assert jnp.allclose(outs, refs, atol=1e-5, rtol=1e-5), "batched mismatch"

    print("KERNEL_OK")
</pallas_src>

<mosaic_0001>
module attributes {stable_mosaic.version = 11 : i64} {
  func.func @_attention_kernel(%arg0: i32, %arg1: memref<1x8x32xf32, #tpu.memory_space<vmem>>, %arg2: memref<3x32x32xf32, #tpu.memory_space<vmem>>, %arg3: memref<3x1x32xf32, #tpu.memory_space<vmem>>, %arg4: memref<1x8x32xf32, #tpu.memory_space<vmem>>) attributes {dimension_semantics = [#tpu.dimension_semantics<parallel>], iteration_bounds = array<i64: 1>, scalar_prefetch = 0 : i64, scratch_operands = 0 : i64, tpu.core_type = #tpu.core_type<tc>, window_params = [{transform_indices = @transform_0, window_bounds = array<i64: 1, 8, 32>}, {pipeline_mode = #tpu.pipeline_mode<synchronous>, transform_indices = @transform_1, window_bounds = array<i64: 3, 32, 32>}, {pipeline_mode = #tpu.pipeline_mode<synchronous>, transform_indices = @transform_2, window_bounds = array<i64: 3, 1, 32>}, {transform_indices = @transform_3, window_bounds = array<i64: 1, 8, 32>}]} {
    %c0 = arith.constant 0 : index
    %c0_0 = arith.constant 0 : index
    %c0_1 = arith.constant 0 : index
    %0 = vector.load %arg1[%c0, %c0_0, %c0_1] : memref<1x8x32xf32, #tpu.memory_space<vmem>>, vector<1x8x32xf32>
    %1 = vector.shape_cast %0 : vector<1x8x32xf32> to vector<8x32xf32>
    %c0_2 = arith.constant 0 : index
    %c0_3 = arith.constant 0 : index
    %c0_4 = arith.constant 0 : index
    %2 = vector.load %arg2[%c0_2, %c0_3, %c0_4] : memref<3x32x32xf32, #tpu.memory_space<vmem>>, vector<1x32x32xf32>
    %3 = vector.shape_cast %2 : vector<1x32x32xf32> to vector<32x32xf32>
    %cst = arith.constant dense<0.000000e+00> : vector<8x32xf32>
    %4 = tpu.matmul %1, %3, %cst {dimension_numbers = #tpu.dot_dimension_numbers<[1], [0], [0], [1], [0, 0, 1, 1], [], []>} : vector<8x32xf32>, vector<32x32xf32>, vector<8x32xf32> -> vector<8x32xf32>
    %c0_5 = arith.constant 0 : index
    %c0_6 = arith.constant 0 : index
    %c0_7 = arith.constant 0 : index
    %5 = vector.load %arg3[%c0_5, %c0_6, %c0_7] : memref<3x1x32xf32, #tpu.memory_space<vmem>>, vector<1x1x32xf32>
    %6 = vector.shape_cast %5 : vector<1x1x32xf32> to vector<1x32xf32>
    %7 = vector.broadcast %6 : vector<1x32xf32> to vector<8x32xf32>
    %8 = arith.addf %4, %7 : vector<8x32xf32>
    %c1 = arith.constant 1 : index
    %c0_8 = arith.constant 0 : index
    %c0_9 = arith.constant 0 : index
    %9 = vector.load %arg2[%c1, %c0_8, %c0_9] : memref<3x32x32xf32, #tpu.memory_space<vmem>>, vector<1x32x32xf32>
    %10 = vector.shape_cast %9 : vector<1x32x32xf32> to vector<32x32xf32>
    %cst_10 = arith.constant dense<0.000000e+00> : vector<8x32xf32>
    %11 = tpu.matmul %1, %10, %cst_10 {dimension_numbers = #tpu.dot_dimension_numbers<[1], [0], [0], [1], [0, 0, 1, 1], [], []>} : vector<8x32xf32>, vector<32x32xf32>, vector<8x32xf32> -> vector<8x32xf32>
    %c1_11 = arith.constant 1 : index
    %c0_12 = arith.constant 0 : index
    %c0_13 = arith.constant 0 : index
    %12 = vector.load %arg3[%c1_11, %c0_12, %c0_13] : memref<3x1x32xf32, #tpu.memory_space<vmem>>, vector<1x1x32xf32>
    %13 = vector.shape_cast %12 : vector<1x1x32xf32> to vector<1x32xf32>
    %14 = vector.broadcast %13 : vector<1x32xf32> to vector<8x32xf32>
    %15 = arith.addf %11, %14 : vector<8x32xf32>
    %c2 = arith.constant 2 : index
    %c0_14 = arith.constant 0 : index
    %c0_15 = arith.constant 0 : index
    %16 = vector.load %arg2[%c2, %c0_14, %c0_15] : memref<3x32x32xf32, #tpu.memory_space<vmem>>, vector<1x32x32xf32>
    %17 = vector.shape_cast %16 : vector<1x32x32xf32> to vector<32x32xf32>
    %cst_16 = arith.constant dense<0.000000e+00> : vector<8x32xf32>
    %18 = tpu.matmul %1, %17, %cst_16 {dimension_numbers = #tpu.dot_dimension_numbers<[1], [0], [0], [1], [0, 0, 1, 1], [], []>} : vector<8x32xf32>, vector<32x32xf32>, vector<8x32xf32> -> vector<8x32xf32>
    %c2_17 = arith.constant 2 : index
    %c0_18 = arith.constant 0 : index
    %c0_19 = arith.constant 0 : index
    %19 = vector.load %arg3[%c2_17, %c0_18, %c0_19] : memref<3x1x32xf32, #tpu.memory_space<vmem>>, vector<1x1x32xf32>
    %20 = vector.shape_cast %19 : vector<1x1x32xf32> to vector<1x32xf32>
    %21 = vector.broadcast %20 : vector<1x32xf32> to vector<8x32xf32>
    %22 = arith.addf %18, %21 : vector<8x32xf32>
    %23 = vector.shape_cast %8 : vector<8x32xf32> to vector<1x8x32xf32>
    %24 = vector.shape_cast %15 : vector<8x32xf32> to vector<1x8x32xf32>
    %25 = vector.shape_cast %22 : vector<8x32xf32> to vector<1x8x32xf32>
    "tpu.trace_start"() <{level = 10 : i32, message = "pqd,pkd->pqk"}> : () -> ()
    %cst_20 = arith.constant dense<0.000000e+00> : vector<1x8x8xf32>
    %26 = tpu.matmul %23, %24, %cst_20 {dimension_numbers = #tpu.dot_dimension_numbers<[2], [2], [1], [1], [0, 0, 0, 1, 1, 1], [0], [0]>} : vector<1x8x32xf32>, vector<1x8x32xf32>, vector<1x8x8xf32> -> vector<1x8x8xf32>
    "tpu.trace_stop"() : () -> ()
    %cst_21 = arith.constant dense<0xFF800000> : vector<1x8xf32>
    %27 = vector.multi_reduction <maximumf>, %26, %cst_21 [2] : vector<1x8x8xf32> to vector<1x8xf32>
    %28 = vector.shape_cast %27 : vector<1x8xf32> to vector<1x8x1xf32>
    %29 = vector.broadcast %28 : vector<1x8x1xf32> to vector<1x8x8xf32>
    %30 = arith.subf %26, %29 : vector<1x8x8xf32>
    %31 = math.exp %30 : vector<1x8x8xf32>
    %cst_22 = arith.constant dense<0.000000e+00> : vector<1x8xf32>
    %32 = vector.multi_reduction <add>, %31, %cst_22 [2] : vector<1x8x8xf32> to vector<1x8xf32>
    %33 = vector.shape_cast %32 : vector<1x8xf32> to vector<1x8x1xf32>
    %34 = tpu.reciprocal %33 : vector<1x8x1xf32> -> vector<1x8x1xf32>
    %35 = vector.broadcast %34 : vector<1x8x1xf32> to vector<1x8x8xf32>
    %36 = arith.mulf %31, %35 : vector<1x8x8xf32>
    "tpu.trace_start"() <{level = 10 : i32, message = "pqk,pkd->pqd"}> : () -> ()
    %cst_23 = arith.constant dense<0.000000e+00> : vector<1x8x32xf32>
    %37 = tpu.matmul %36, %25, %cst_23 {dimension_numbers = #tpu.dot_dimension_numbers<[2], [1], [1], [2], [0, 0, 0, 1, 1, 2], [0], [0]>} : vector<1x8x8xf32>, vector<1x8x32xf32>, vector<1x8x32xf32> -> vector<1x8x32xf32>
    "tpu.trace_stop"() : () -> ()
    %c0_24 = arith.constant 0 : index
    %c0_25 = arith.constant 0 : index
    %c0_26 = arith.constant 0 : index
    %38 = vector.load %arg4[%c0_24, %c0_25, %c0_26] : memref<1x8x32xf32, #tpu.memory_space<vmem>>, vector<1x8x32xf32>
    tpu.vector_store %arg4[%c0_24, %c0_25, %c0_26], %37 {strides = array<i32>} : memref<1x8x32xf32, #tpu.memory_space<vmem>>, vector<1x8x32xf32>,
    return
  }
  func.func @transform_0(%arg0: i32) -> (i32, i32, i32) {
    %c0_i32 = arith.constant 0 : i32
    %c0_i32_0 = arith.constant 0 : i32
    %c0_i32_1 = arith.constant 0 : i32
    return %arg0, %c0_i32, %c0_i32_0 : i32, i32, i32
  }
  func.func @transform_1(%arg0: i32) -> (i32, i32, i32) {
    %c0_i32 = arith.constant 0 : i32
    %c0_i32_0 = arith.constant 0 : i32
    %c0_i32_1 = arith.constant 0 : i32
    %c0_i32_2 = arith.constant 0 : i32
    return %c0_i32, %c0_i32_0, %c0_i32_1 : i32, i32, i32
  }
  func.func @transform_2(%arg0: i32) -> (i32, i32, i32) {
    %c0_i32 = arith.constant 0 : i32
    %c0_i32_0 = arith.constant 0 : i32
    %c0_i32_1 = arith.constant 0 : i32
    %c0_i32_2 = arith.constant 0 : i32
    return %c0_i32, %c0_i32_0, %c0_i32_1 : i32, i32, i32
  }
  func.func @transform_3(%arg0: i32) -> (i32, i32, i32) {
    %c0_i32 = arith.constant 0 : i32
    %c0_i32_0 = arith.constant 0 : i32
    %c0_i32_1 = arith.constant 0 : i32
    return %arg0, %c0_i32, %c0_i32_0 : i32, i32, i32
  }
}

</mosaic_0001>

<llo_original>
// kernel: self_attention_batched.1
$region0: #{self_attention_batched.1}
  #allocation0 [shape = 'u32[]', space=smem, size = 0x4, offset = 0x4, fixed_abs, tag = 'smem constant byte address 0x4 - core index']
  #allocation1 [shape = 'u32[144,128]{1,0:T(1,128)}', space=vmem, size = 0x12000, scoped, tag = 'internal scratch']
  %s0 = inlined_call_operand.hbm [shape: f32[1,8,32], index: 0, kind: input, shape index: {}]
  %s1 = inlined_call_operand.hbm [shape: f32[3,32,32], index: 1, kind: input, shape index: {}]
  %s2 = inlined_call_operand.vmem [shape: f32[3,1,32], index: 2, kind: input, shape index: {}]
  %s3 = inlined_call_operand.hbm [shape: f32[1,8,32], index: 3, kind: output, shape index: {}]
  %s4 = sld [smem:[#allocation0]]
  $region30: #{self_attention_batched.1} parent=0
    _
  %s6 = ssub.s32 1, %s4
  %s7 = scalar_select 0, %s6, %s4
  $region1: #{self_attention_batched.1} parent=0
    #allocation2 [shape = 'u8[4096]{0}', space=vmem, size = 0x1000, scoped, tag = 'input window, operand 0, single buffered']
    #allocation3 [shape = 's32[1]{0}', space=sflag, size = 0x4, scoped, tag = 'scoped memory for self_attention_batched.1']
    #allocation4 [shape = 's32[1]{0}', space=sflag, size = 0x4, scoped, tag = 'scoped memory for self_attention_batched.1']
    #allocation5 [shape = 'u8[49152]{0}', space=vmem, size = 0xc000, scoped, tag = 'input window, operand 1, single buffered']
    #allocation6 [shape = 's32[1]{0}', space=sflag, size = 0x4, scoped, tag = 'scoped memory for self_attention_batched.1']
    #allocation7 [shape = 'u8[4096]{0}', space=vmem, size = 0x1000, scoped, tag = 'output window, operand 0, single buffered']
    %8 = vsyncpa [#allocation3], 0
    %9 = vsyncpa [#allocation6], 0
    %10 = vsyncpa [#allocation4], 0
    // Predicated region
    $region2: #{self_attention_batched.1} parent=1 // pred_check
      _
    $region3: #{self_attention_batched.1} parent=1 // pred_check_branch
      %12 = sbr.rel (0) target = $region5
    $region4: #{self_attention_batched.1} parent=1 // pred_region
      %s14 = ssub.s32 128, 128
      %15 = vsyncadd [#allocation3], %s14
      %s17 = sshll.u32 [#allocation2], 4
      %s18 = int_to_ptr.vmem [resolvable:$true] %s17
      %20 = dma.hbm_to_vmem [thread:$0]  %s0, 128, %s18, [#allocation3]
    $region5: #{self_attention_batched.1} parent=1 // pred_fallthru
      _
    // Predicated region
    $region6: #{self_attention_batched.1} parent=1 // pred_check
      _
    $region7: #{self_attention_batched.1} parent=1 // pred_check_branch
      %22 = sbr.rel (0) target = $region9
    $region8: #{self_attention_batched.1} parent=1 // pred_region
      %s24 = ssub.s32 1536, 1536
      %25 = vsyncadd [#allocation6], %s24
      %s26 = sshll.u32 [#allocation5], 4
      %s27 = int_to_ptr.vmem [resolvable:$true] %s26
      %32 = dma.hbm_to_vmem [thread:$0]  %s1, 1536, %s27, [#allocation6], 128, 128, 8
    $region9: #{self_attention_batched.1} parent=1 // pred_fallthru
      _
    // Predicated region
    $region10: #{self_attention_batched.1} parent=1 // pred_check
      _
    $region11: #{self_attention_batched.1} parent=1 // pred_check_branch
      %34 = sbr.rel (0) target = $region13
    $region12: #{self_attention_batched.1} parent=1 // pred_region
      _
    $region13: #{self_attention_batched.1} parent=1 // pred_fallthru
      _
    // Predicated region
    $region14: #{self_attention_batched.1} parent=1 // pred_check
      _
    $region15: #{self_attention_batched.1} parent=1 // pred_check_branch
      %36 = sbr.rel (0) target = $region17
    $region16: #{self_attention_batched.1} parent=1 // pred_region
      %37 = dma.done [#allocation3], 128
    $region17: #{self_attention_batched.1} parent=1 // pred_fallthru
      _
    // Predicated region
    $region18: #{self_attention_batched.1} parent=1 // pred_check
      _
    $region19: #{self_attention_batched.1} parent=1 // pred_check_branch
      %39 = sbr.rel (0) target = $region21
    $region20: #{self_attention_batched.1} parent=1 // pred_region
      %40 = dma.done [#allocation6], 1536
    $region21: #{self_attention_batched.1} parent=1 // pred_fallthru
      _
    %v41 = vld [vmem:[#allocation2] sm:$0xff]
    %v42 = vld [vmem:[#allocation5] sm:$0xff]
    %v43 = vld [vmem:[#allocation5 + $0x8] sm:$0xff]
    %v44 = vld [vmem:[#allocation5 + $0x10] sm:$0xff]
    %v45 = vld [vmem:[#allocation5 + $0x18] sm:$0xff]
    %v46 = vld [vmem:[%s2] sm:$0x1]
    %v48 = vlaneseq
    %v49 = vshrl.u32 %v48, 7
    %v50 = vsub.s32 0, %v49
    %v51 = vrot.slane %v46, %v50
    %vm53 = vcmask 261120
    %v55 = vsel %vm53, %v41, 0
    %57 = vmatprep.subr.mxu0 0.0
    %58 = vmatpush1.msra.mxu0 %v42
    %59 = vmatprep.subr.mxu0 0.0
    %60 = vmatpush1.msra.mxu0 %v43
    %61 = vmatprep.subr.mxu0 0.0
    %62 = vmatpush1.msra.mxu0 %v44
    %63 = vmatprep.subr.mxu0 0.0
    %64 = vmatpush1.msra.mxu0 %v45
    %65 = vmatprep.subr.mxu0 0.0
    %66 = vmatpush1.msra.mxu0 0.0
    %67 = vmatprep.subr.mxu0 0.0
    %68 = vmatpush1.msra.mxu0 0.0
    %69 = vmatprep.subr.mxu0 0.0
    %70 = vmatpush1.msra.mxu0 0.0
    %71 = vmatprep.subr.mxu0 0.0
    %72 = vmatpush1.msra.mxu0 0.0
    %73 = vmatprep.subr.mxu0 0.0
    %74 = vmatpush1.msra.mxu0 0.0
    %75 = vmatprep.subr.mxu0 0.0
    %76 = vmatpush1.msra.mxu0 0.0
    %77 = vmatprep.subr.mxu0 0.0
    %78 = vmatpush1.msra.mxu0 0.0
    %79 = vmatprep.subr.mxu0 0.0
    %80 = vmatpush1.msra.mxu0 0.0
    %81 = vmatprep.subr.mxu0 0.0
    %82 = vmatpush1.msra.mxu0 0.0
    %83 = vmatprep.subr.mxu0 0.0
    %84 = vmatpush1.msra.mxu0 0.0
    %85 = vmatprep.subr.mxu0 0.0
    %86 = vmatpush1.msra.mxu0 0.0
    %87 = vmatprep.subr.mxu0 0.0
    %88 = vmatpush1.msra.mxu0 0.0
    %89 = vmatprep.subr.mxu0 0.0
    %90 = vmatpush1.msra.mxu0 0.0
    %91 = vmatprep.subr.mxu0 0.0
    %92 = vmatpush1.msra.mxu0 0.0
    %93 = vmatprep.subr.mxu0 0.0
    %94 = vmatpush1.msra.mxu0 0.0
    %95 = vmatprep.subr.mxu0 0.0
    %96 = vmatpush1.msra.mxu0 0.0
    %97 = vmatprep.subr.mxu0 0.0
    %98 = vmatpush1.msra.mxu0 0.0
    %99 = vmatprep.subr.mxu0 0.0
    %100 = vmatpush1.msra.mxu0 0.0
    %101 = vmatprep.subr.mxu0 0.0
    %102 = vmatpush1.msra.mxu0 0.0
    %103 = vmatprep.subr.mxu0 0.0
    %104 = vmatpush1.msra.mxu0 0.0
    %105 = vmatprep.subr.mxu0 0.0
    %106 = vmatpush1.msra.mxu0 0.0
    %107 = vmatprep.subr.mxu0 0.0
    %108 = vmatpush1.msra.mxu0 0.0
    %109 = vmatprep.subr.mxu0 0.0
    %110 = vmatpush1.msra.mxu0 0.0
    %111 = vmatprep.subr.mxu0 0.0
    %112 = vmatpush1.msra.mxu0 0.0
    %113 = vmatprep.subr.mxu0 0.0
    %114 = vmatpush1.msra.mxu0 0.0
    %115 = vmatprep.subr.mxu0 0.0
    %116 = vmatpush1.msra.mxu0 0.0
    %117 = vmatprep.subr.mxu0 0.0
    %118 = vmatpush1.msra.mxu0 0.0
    %119 = vmatprep.subr.mxu0 0.0
    %120 = vmatpush1.msra.mxu0 0.0
    %121 = vmatprep.mubr.f32.mxu0 0.0
    %122 = vmatmul.mubr.f32.gmra.mrb[0].mxu0 %v55
    %v123 = vpop.f32.mrb[0].mxu0
    %v124 = vadd.f32 %v51, %v123
    %v125 = vpop.f32.mrb[0].mxu0
    %126 = vdwg.mxu0
    %s127 = scalar_lea.vmem [#allocation5], 32
    %v128 = vld [vmem:[%s127] sm:$0xff]
    %v129 = vld [vmem:[%s127 + $0x8] sm:$0xff]
    %v130 = vld [vmem:[%s127 + $0x10] sm:$0xff]
    %v131 = vld [vmem:[%s127 + $0x18] sm:$0xff]
    %s132 = scalar_lea.vmem %s2, 1
    %v133 = vld [vmem:[%s132] sm:$0x1]
    %v135 = vlaneseq
    %v136 = vshrl.u32 %v135, 7
    %v137 = vsub.s32 0, %v136
    %v138 = vrot.slane %v133, %v137
    %140 = vmatprep.subr.mxu0 0.0
    %141 = vmatpush1.msra.mxu0 %v128
    %142 = vmatprep.subr.mxu0 0.0
    %143 = vmatpush1.msra.mxu0 %v129
    %144 = vmatprep.subr.mxu0 0.0
    %145 = vmatpush1.msra.mxu0 %v130
    %146 = vmatprep.subr.mxu0 0.0
    %147 = vmatpush1.msra.mxu0 %v131
    %148 = vmatprep.subr.mxu0 0.0
    %149 = vmatpush1.msra.mxu0 0.0
    %150 = vmatprep.subr.mxu0 0.0
    %151 = vmatpush1.msra.mxu0 0.0
    %152 = vmatprep.subr.mxu0 0.0
    %153 = vmatpush1.msra.mxu0 0.0
    %154 = vmatprep.subr.mxu0 0.0
    %155 = vmatpush1.msra.mxu0 0.0
    %156 = vmatprep.subr.mxu0 0.0
    %157 = vmatpush1.msra.mxu0 0.0
    %158 = vmatprep.subr.mxu0 0.0
    %159 = vmatpush1.msra.mxu0 0.0
    %160 = vmatprep.subr.mxu0 0.0
    %161 = vmatpush1.msra.mxu0 0.0
    %162 = vmatprep.subr.mxu0 0.0
    %163 = vmatpush1.msra.mxu0 0.0
    %164 = vmatprep.subr.mxu0 0.0
    %165 = vmatpush1.msra.mxu0 0.0
    %166 = vmatprep.subr.mxu0 0.0
    %167 = vmatpush1.msra.mxu0 0.0
    %168 = vmatprep.subr.mxu0 0.0
    %169 = vmatpush1.msra.mxu0 0.0
    %170 = vmatprep.subr.mxu0 0.0
    %171 = vmatpush1.msra.mxu0 0.0
    %172 = vmatprep.subr.mxu0 0.0
    %173 = vmatpush1.msra.mxu0 0.0
    %174 = vmatprep.subr.mxu0 0.0
    %175 = vmatpush1.msra.mxu0 0.0
    %176 = vmatprep.subr.mxu0 0.0
    %177 = vmatpush1.msra.mxu0 0.0
    %178 = vmatprep.subr.mxu0 0.0
    %179 = vmatpush1.msra.mxu0 0.0
    %180 = vmatprep.subr.mxu0 0.0
    %181 = vmatpush1.msra.mxu0 0.0
    %182 = vmatprep.subr.mxu0 0.0
    %183 = vmatpush1.msra.mxu0 0.0
    %184 = vmatprep.subr.mxu0 0.0
    %185 = vmatpush1.msra.mxu0 0.0
    %186 = vmatprep.subr.mxu0 0.0
    %187 = vmatpush1.msra.mxu0 0.0
    %188 = vmatprep.subr.mxu0 0.0
    %189 = vmatpush1.msra.mxu0 0.0
    %190 = vmatprep.subr.mxu0 0.0
    %191 = vmatpush1.msra.mxu0 0.0
    %192 = vmatprep.subr.mxu0 0.0
    %193 = vmatpush1.msra.mxu0 0.0
    %194 = vmatprep.subr.mxu0 0.0
    %195 = vmatpush1.msra.mxu0 0.0
    %196 = vmatprep.subr.mxu0 0.0
    %197 = vmatpush1.msra.mxu0 0.0
    %198 = vmatprep.subr.mxu0 0.0
    %199 = vmatpush1.msra.mxu0 0.0
    %200 = vmatprep.subr.mxu0 0.0
    %201 = vmatpush1.msra.mxu0 0.0
    %202 = vmatprep.subr.mxu0 0.0
    %203 = vmatpush1.msra.mxu0 0.0
    %204 = vmatprep.mubr.f32.mxu0 0.0
    %205 = vmatmul.mubr.f32.gmra.mrb[0].mxu0 %v55
    %v206 = vpop.f32.mrb[0].mxu0
    %v207 = vadd.f32 %v138, %v206
    %v208 = vpop.f32.mrb[0].mxu0
    %209 = vdwg.mxu0
    %s210 = scalar_lea.vmem [#allocation5], 64
    %v211 = vld [vmem:[%s210] sm:$0xff]
    %v212 = vld [vmem:[%s210 + $0x8] sm:$0xff]
    %v213 = vld [vmem:[%s210 + $0x10] sm:$0xff]
    %v214 = vld [vmem:[%s210 + $0x18] sm:$0xff]
    %s215 = scalar_lea.vmem %s2, 2
    %v216 = vld [vmem:[%s215] sm:$0x1]
    %v218 = vlaneseq
    %v219 = vshrl.u32 %v218, 7
    %v220 = vsub.s32 0, %v219
    %v221 = vrot.slane %v216, %v220
    %223 = vmatprep.subr.mxu0 0.0
    %224 = vmatpush1.msra.mxu0 %v211
    %225 = vmatprep.subr.mxu0 0.0
    %226 = vmatpush1.msra.mxu0 %v212
    %227 = vmatprep.subr.mxu0 0.0
    %228 = vmatpush1.msra.mxu0 %v213
    %229 = vmatprep.subr.mxu0 0.0
    %230 = vmatpush1.msra.mxu0 %v214
    %231 = vmatprep.subr.mxu0 0.0
    %232 = vmatpush1.msra.mxu0 0.0
    %233 = vmatprep.subr.mxu0 0.0
    %234 = vmatpush1.msra.mxu0 0.0
    %235 = vmatprep.subr.mxu0 0.0
    %236 = vmatpush1.msra.mxu0 0.0
    %237 = vmatprep.subr.mxu0 0.0
    %238 = vmatpush1.msra.mxu0 0.0
    %239 = vmatprep.subr.mxu0 0.0
    %240 = vmatpush1.msra.mxu0 0.0
    %241 = vmatprep.subr.mxu0 0.0
    %242 = vmatpush1.msra.mxu0 0.0
    %243 = vmatprep.subr.mxu0 0.0
    %244 = vmatpush1.msra.mxu0 0.0
    %245 = vmatprep.subr.mxu0 0.0
    %246 = vmatpush1.msra.mxu0 0.0
    %247 = vmatprep.subr.mxu0 0.0
    %248 = vmatpush1.msra.mxu0 0.0
    %249 = vmatprep.subr.mxu0 0.0
    %250 = vmatpush1.msra.mxu0 0.0
    %251 = vmatprep.subr.mxu0 0.0
    %252 = vmatpush1.msra.mxu0 0.0
    %253 = vmatprep.subr.mxu0 0.0
    %254 = vmatpush1.msra.mxu0 0.0
    %255 = vmatprep.subr.mxu0 0.0
    %256 = vmatpush1.msra.mxu0 0.0
    %257 = vmatprep.subr.mxu0 0.0
    %258 = vmatpush1.msra.mxu0 0.0
    %259 = vmatprep.subr.mxu0 0.0
    %260 = vmatpush1.msra.mxu0 0.0
    %261 = vmatprep.subr.mxu0 0.0
    %262 = vmatpush1.msra.mxu0 0.0
    %263 = vmatprep.subr.mxu0 0.0
    %264 = vmatpush1.msra.mxu0 0.0
    %265 = vmatprep.subr.mxu0 0.0
    %266 = vmatpush1.msra.mxu0 0.0
    %267 = vmatprep.subr.mxu0 0.0
    %268 = vmatpush1.msra.mxu0 0.0
    %269 = vmatprep.subr.mxu0 0.0
    %270 = vmatpush1.msra.mxu0 0.0
    %271 = vmatprep.subr.mxu0 0.0
    %272 = vmatpush1.msra.mxu0 0.0
    %273 = vmatprep.subr.mxu0 0.0
    %274 = vmatpush1.msra.mxu0 0.0
    %275 = vmatprep.subr.mxu0 0.0
    %276 = vmatpush1.msra.mxu0 0.0
    %277 = vmatprep.subr.mxu0 0.0
    %278 = vmatpush1.msra.mxu0 0.0
    %279 = vmatprep.subr.mxu0 0.0
    %280 = vmatpush1.msra.mxu0 0.0
    %281 = vmatprep.subr.mxu0 0.0
    %282 = vmatpush1.msra.mxu0 0.0
    %283 = vmatprep.subr.mxu0 0.0
    %284 = vmatpush1.msra.mxu0 0.0
    %285 = vmatprep.subr.mxu0 0.0
    %286 = vmatpush1.msra.mxu0 0.0
    %287 = vmatprep.mubr.f32.mxu0 0.0
    %288 = vmatmul.mubr.f32.gmra.mrb[0].mxu0 %v55
    %v289 = vpop.f32.mrb[0].mxu0
    %v290 = vadd.f32 %v221, %v289
    %v291 = vpop.f32.mrb[0].mxu0
    %292 = vdwg.mxu0
    %v294 = vsel %vm53, %v124, 0
    %v297 = vsel %vm53, %v207, 0
    %299 = vmatprep.subr.mxu0 0.0
    %300 = vmatpush1.xpose.msra.mxu0 %v297
    %301 = vmatprep.subr.mxu0 0.0
    %302 = vmatpush1.xpose.msra.mxu0 0.0
    %303 = vmatprep.subr.mxu0 0.0
    %304 = vmatpush1.xpose.msra.mxu0 0.0
    %305 = vmatprep.subr.mxu0 0.0
    %306 = vmatpush1.xpose.msra.mxu0 0.0
    %307 = vmatprep.subr.mxu0 0.0
    %308 = vmatpush1.xpose.msra.mxu0 0.0
    %309 = vmatprep.subr.mxu0 0.0
    %310 = vmatpush1.xpose.msra.mxu0 0.0
    %311 = vmatprep.subr.mxu0 0.0
    %312 = vmatpush1.xpose.msra.mxu0 0.0
    %313 = vmatprep.subr.mxu0 0.0
    %314 = vmatpush1.xpose.msra.mxu0 0.0
    %315 = vmatprep.subr.mxu0 0.0
    %316 = vmatpush1.xpose.msra.mxu0 0.0
    %317 = vmatprep.subr.mxu0 0.0
    %318 = vmatpush1.xpose.msra.mxu0 0.0
    %319 = vmatprep.subr.mxu0 0.0
    %320 = vmatpush1.xpose.msra.mxu0 0.0
    %321 = vmatprep.subr.mxu0 0.0
    %322 = vmatpush1.xpose.msra.mxu0 0.0
    %323 = vmatprep.subr.mxu0 0.0
    %324 = vmatpush1.xpose.msra.mxu0 0.0
    %325 = vmatprep.subr.mxu0 0.0
    %326 = vmatpush1.xpose.msra.mxu0 0.0
    %327 = vmatprep.subr.mxu0 0.0
    %328 = vmatpush1.xpose.msra.mxu0 0.0
    %329 = vmatprep.subr.mxu0 0.0
    %330 = vmatpush1.xpose.msra.mxu0 0.0
    %331 = vmatprep.subr.mxu0 0.0
    %332 = vmatpush1.xpose.msra.mxu0 0.0
    %333 = vmatprep.subr.mxu0 0.0
    %334 = vmatpush1.xpose.msra.mxu0 0.0
    %335 = vmatprep.subr.mxu0 0.0
    %336 = vmatpush1.xpose.msra.mxu0 0.0
    %337 = vmatprep.subr.mxu0 0.0
    %338 = vmatpush1.xpose.msra.mxu0 0.0
    %339 = vmatprep.subr.mxu0 0.0
    %340 = vmatpush1.xpose.msra.mxu0 0.0
    %341 = vmatprep.subr.mxu0 0.0
    %342 = vmatpush1.xpose.msra.mxu0 0.0
    %343 = vmatprep.subr.mxu0 0.0
    %344 = vmatpush1.xpose.msra.mxu0 0.0
    %345 = vmatprep.subr.mxu0 0.0
    %346 = vmatpush1.xpose.msra.mxu0 0.0
    %347 = vmatprep.subr.mxu0 0.0
    %348 = vmatpush1.xpose.msra.mxu0 0.0
    %349 = vmatprep.subr.mxu0 0.0
    %350 = vmatpush1.xpose.msra.mxu0 0.0
    %351 = vmatprep.subr.mxu0 0.0
    %352 = vmatpush1.xpose.msra.mxu0 0.0
    %353 = vmatprep.subr.mxu0 0.0
    %354 = vmatpush1.xpose.msra.mxu0 0.0
    %355 = vmatprep.subr.mxu0 0.0
    %356 = vmatpush1.xpose.msra.mxu0 0.0
    %357 = vmatprep.subr.mxu0 0.0
    %358 = vmatpush1.xpose.msra.mxu0 0.0
    %359 = vmatprep.subr.mxu0 0.0
    %360 = vmatpush1.xpose.msra.mxu0 0.0
    %361 = vmatprep.subr.mxu0 0.0
    %362 = vmatpush1.xpose.msra.mxu0 0.0
    %363 = vmatprep.mubr.f32.mxu0 0.0
    %364 = vmatmul.mubr.f32.gmra.mrb[0].mxu0 %v294
    %v365 = vpop.f32.mrb[0].mxu0
    %v366 = vadd.f32 0.0, %v365
    %v367 = vpop.f32.mrb[0].mxu0
    %368 = vdwg.mxu0
    %vm369 = vcmask 64512
    %v370 = vsel %vm369, %v366, -inf
    %371 = vmax.xlane.f32.xlu0 %v370
    %v372 = vpop.xlane.xlu0 %371
    %v373 = vsub.f32 %v366, %v372
    %v374 = vmul.f32 %v373, 1.442695
    %v375 = vpow.pop %v374
    %v376 = vsel %vm369, %v375, 0.0
    %377 = vadd.xlane.f32.xlu0 %v376
    %v378 = vpop.xlane.xlu0 %377
    %v379 = vrcp.pop %v378
    %v380 = vmul.f32 %v375, %v379
    %v382 = vsel %vm369, %v380, 0
    %384 = vmatprep.subr.mxu0 0.0
    %385 = vmatpush1.msra.mxu0 %v290
    %386 = vmatprep.subr.mxu0 0.0
    %387 = vmatpush1.msra.mxu0 0.0
    %388 = vmatprep.subr.mxu0 0.0
    %389 = vmatpush1.msra.mxu0 0.0
    %390 = vmatprep.subr.mxu0 0.0
    %391 = vmatpush1.msra.mxu0 0.0
    %392 = vmatprep.subr.mxu0 0.0
    %393 = vmatpush1.msra.mxu0 0.0
    %394 = vmatprep.subr.mxu0 0.0
    %395 = vmatpush1.msra.mxu0 0.0
    %396 = vmatprep.subr.mxu0 0.0
    %397 = vmatpush1.msra.mxu0 0.0
    %398 = vmatprep.subr.mxu0 0.0
    %399 = vmatpush1.msra.mxu0 0.0
    %400 = vmatprep.subr.mxu0 0.0
    %401 = vmatpush1.msra.mxu0 0.0
    %402 = vmatprep.subr.mxu0 0.0
    %403 = vmatpush1.msra.mxu0 0.0
    %404 = vmatprep.subr.mxu0 0.0
    %405 = vmatpush1.msra.mxu0 0.0
    %406 = vmatprep.subr.mxu0 0.0
    %407 = vmatpush1.msra.mxu0 0.0
    %408 = vmatprep.subr.mxu0 0.0
    %409 = vmatpush1.msra.mxu0 0.0
    %410 = vmatprep.subr.mxu0 0.0
    %411 = vmatpush1.msra.mxu0 0.0
    %412 = vmatprep.subr.mxu0 0.0
    %413 = vmatpush1.msra.mxu0 0.0
    %414 = vmatprep.subr.mxu0 0.0
    %415 = vmatpush1.msra.mxu0 0.0
    %416 = vmatprep.subr.mxu0 0.0
    %417 = vmatpush1.msra.mxu0 0.0
    %418 = vmatprep.subr.mxu0 0.0
    %419 = vmatpush1.msra.mxu0 0.0
    %420 = vmatprep.subr.mxu0 0.0
    %421 = vmatpush1.msra.mxu0 0.0
    %422 = vmatprep.subr.mxu0 0.0
    %423 = vmatpush1.msra.mxu0 0.0
    %424 = vmatprep.subr.mxu0 0.0
    %425 = vmatpush1.msra.mxu0 0.0
    %426 = vmatprep.subr.mxu0 0.0
    %427 = vmatpush1.msra.mxu0 0.0
    %428 = vmatprep.subr.mxu0 0.0
    %429 = vmatpush1.msra.mxu0 0.0
    %430 = vmatprep.subr.mxu0 0.0
    %431 = vmatpush1.msra.mxu0 0.0
    %432 = vmatprep.subr.mxu0 0.0
    %433 = vmatpush1.msra.mxu0 0.0
    %434 = vmatprep.subr.mxu0 0.0
    %435 = vmatpush1.msra.mxu0 0.0
    %436 = vmatprep.subr.mxu0 0.0
    %437 = vmatpush1.msra.mxu0 0.0
    %438 = vmatprep.subr.mxu0 0.0
    %439 = vmatpush1.msra.mxu0 0.0
    %440 = vmatprep.subr.mxu0 0.0
    %441 = vmatpush1.msra.mxu0 0.0
    %442 = vmatprep.subr.mxu0 0.0
    %443 = vmatpush1.msra.mxu0 0.0
    %444 = vmatprep.subr.mxu0 0.0
    %445 = vmatpush1.msra.mxu0 0.0
    %446 = vmatprep.subr.mxu0 0.0
    %447 = vmatpush1.msra.mxu0 0.0
    %448 = vmatprep.mubr.f32.mxu0 0.0
    %449 = vmatmul.mubr.f32.gmra.mrb[0].mxu0 %v382
    %v450 = vpop.f32.mrb[0].mxu0
    %v451 = vadd.f32 0.0, %v450
    %v452 = vpop.f32.mrb[0].mxu0
    %453 = vdwg.mxu0
    %454 = vst.msk [vmem:[#allocation7] sm:$0xff] %vm53, %v451
    // Predicated region
    $region22: #{self_attention_batched.1} parent=1 // pred_check
      _
    $region23: #{self_attention_batched.1} parent=1 // pred_check_branch
      %456 = sbr.rel (0) target = $region25
    $region24: #{self_attention_batched.1} parent=1 // pred_region
      %s458 = ssub.s32 128, 128
      %459 = vsyncadd [#allocation4], %s458
      %s461 = sshll.u32 [#allocation7], 4
      %s462 = int_to_ptr.vmem [resolvable:$true] %s461
      %464 = dma.vmem_to_hbm [thread:$0]  %s462, 128, %s3, [#allocation4]
    $region25: #{self_attention_batched.1} parent=1 // pred_fallthru
      _
    // Predicated region
    $region26: #{self_attention_batched.1} parent=1 // pred_check
      _
    $region27: #{self_attention_batched.1} parent=1 // pred_check_branch
      %466 = sbr.rel (0) target = $region29
    $region28: #{self_attention_batched.1} parent=1 // pred_region
      %467 = dma.done [#allocation4], 128
    $region29: #{self_attention_batched.1} parent=1 // pred_fallthru
      _
    %468 = vsyncpa [#allocation3], 1
    %469 = vsyncpa [#allocation6], 1
    %470 = vsyncpa [#allocation4], 1

</llo_original>
